<compile_context>
chip_gen: v6e
topology: v6e:2x2x1
jax: 0.10.0
libtpu: 0.0.40
codegen_flags: <defaults>
</compile_context>

<pallas_src>
import functools

import jax
import jax.numpy as jnp
from jax.experimental import pallas as pl
from jax.experimental.pallas import tpu as pltpu


# ---------------------------------------------------------------------------
# Tiling helpers
# ---------------------------------------------------------------------------
def _row_tile(n, target=512):
    """Largest row tile <= target that divides n (full n for small inputs)."""
    if n <= target:
        return n
    for t in (target, 256, 128, 64, 32, 16, 8):
        if n % t == 0:
            return t
    return n


def _time_block(t, target=8):
    """Timesteps processed per sequential grid step (must divide T).

    target=8 keeps the double-buffered (ts, B, 4H) gate blocks + resident W_hh
    comfortably inside the 32 MiB default scoped-VMEM limit at production sizes
    (B=32, H=1024) while still amortizing per-grid-step overhead.
    """
    for ts in (target, 4, 2, 1):
        if t % ts == 0:
            return ts
    return 1


# ---------------------------------------------------------------------------
# Kernel 1: per-channel sum / sum-of-squares over packed rows (tiled reduction)
# ---------------------------------------------------------------------------
def _bn_stats_kernel(x_ref, sum_ref, sq_ref):
    @pl.when(pl.program_id(0) == 0)
    def _():
        sum_ref[...] = jnp.zeros_like(sum_ref)
        sq_ref[...] = jnp.zeros_like(sq_ref)

    x = x_ref[...]                                           # (tm, C) f32
    sum_ref[...] += jnp.sum(x, axis=0, keepdims=True)
    sq_ref[...] += jnp.sum(x * x, axis=0, keepdims=True)


def bn_batch_stats(x_flat):
    """x_flat: (N, C) f32 -> (mean, biased var), each (C,) f32."""
    n, c = x_flat.shape
    tm = _row_tile(n)
    s, sq = pl.pallas_call(
        _bn_stats_kernel,
        out_shape=(jax.ShapeDtypeStruct((1, c), jnp.float32),
                   jax.ShapeDtypeStruct((1, c), jnp.float32)),
        grid_spec=pltpu.PrefetchScalarGridSpec(
            num_scalar_prefetch=0,
            grid=(n // tm,),
            in_specs=[pl.BlockSpec((tm, c), lambda i: (i, 0))],
            out_specs=[pl.BlockSpec((1, c), lambda i: (0, 0)),
                       pl.BlockSpec((1, c), lambda i: (0, 0))],
        ),
        compiler_params=pltpu.CompilerParams(
            dimension_semantics=("arbitrary",)),   # accumulator across row tiles
    )(x_flat)
    mean = s[0] / n
    var = jnp.maximum(sq[0] / n - mean * mean, 0.0)          # biased (PyTorch norm)
    return mean, var


# ---------------------------------------------------------------------------
# Kernel 2: BN-folded input projection for all timesteps & both directions.
#   gx_dir = (x * bn_scale) @ W_ih_dir^T + (bn_shift @ W_ih_dir^T)
# done as x @ W_eff + bias with W_eff pre-scaled in the wrapper (bf16 on the MXU).
# Outputs stored in matmul_dtype to halve the HBM traffic feeding the recurrence.
# ---------------------------------------------------------------------------
def _proj_kernel(x_ref, wf_ref, wb_ref, bf_ref, bb_ref, gf_ref, gb_ref, *, mm_dtype):
    x = x_ref[...].astype(mm_dtype)                          # cast in-kernel (no extra HBM pass)
    gf_ref[...] = (jnp.dot(x, wf_ref[...], preferred_element_type=jnp.float32)
                   + bf_ref[...]).astype(gf_ref.dtype)
    gb_ref[...] = (jnp.dot(x, wb_ref[...], preferred_element_type=jnp.float32)
                   + bb_ref[...]).astype(gb_ref.dtype)


def input_projection(x_flat, wf_eff, wb_eff, bias_f, bias_b, mm_dtype):
    """x_flat: (N, C) f32; w*_eff: (C, 4H) mm_dtype; bias_*: (4H,) f32.
    Returns gx_f, gx_b: (N, 4H) mm_dtype (gates accumulated in f32, then cast)."""
    n, c = x_flat.shape
    g = wf_eff.shape[1]
    tm = _row_tile(n)
    bf2 = bias_f.reshape(1, g).astype(jnp.float32)
    bb2 = bias_b.reshape(1, g).astype(jnp.float32)
    # NOTE: for production sizes (C=H=1024) the resident bf16 weights are 8 MiB
    # each; raise vmem_limit_bytes via CompilerParams if the scoped default is hit.
    return pl.pallas_call(
        functools.partial(_proj_kernel, mm_dtype=mm_dtype),
        out_shape=(jax.ShapeDtypeStruct((n, g), mm_dtype),
                   jax.ShapeDtypeStruct((n, g), mm_dtype)),
        grid_spec=pltpu.PrefetchScalarGridSpec(
            num_scalar_prefetch=0,
            grid=(n // tm,),
            in_specs=[
                pl.BlockSpec((tm, c), lambda i: (i, 0)),
                pl.BlockSpec((c, g), lambda i: (0, 0)),     # resident weights
                pl.BlockSpec((c, g), lambda i: (0, 0)),
                pl.BlockSpec((1, g), lambda i: (0, 0)),
                pl.BlockSpec((1, g), lambda i: (0, 0)),
            ],
            out_specs=[pl.BlockSpec((tm, g), lambda i: (i, 0)),
                       pl.BlockSpec((tm, g), lambda i: (i, 0))],
        ),
        compiler_params=pltpu.CompilerParams(
            dimension_semantics=("parallel",)),
    )(x_flat, wf_eff, wb_eff, bf2, bb2)


# ---------------------------------------------------------------------------
# Kernel 3: fused bidirectional LSTM recurrence, time-blocked.
#   Grid step s: forward consumes block s, backward consumes block S-1-s
#   (time reversal expressed purely in the index_maps).  Only the recurrent
#   (B,H)@(H,4H) matmul remains inside the sequential loop.
#   Gate order (permuted offline): [i, f, o, g].
# ---------------------------------------------------------------------------
def _bilstm_kernel(gxf_ref, gxb_ref, whf_ref, whb_ref, of_ref, ob_ref,
                   hf_scr, cf_scr, hb_scr, cb_scr, *, hidden, ts, mm_dtype):
    @pl.when(pl.program_id(0) == 0)
    def _():
        hf_scr[...] = jnp.zeros_like(hf_scr)
        cf_scr[...] = jnp.zeros_like(cf_scr)
        hb_scr[...] = jnp.zeros_like(hb_scr)
        cb_scr[...] = jnp.zeros_like(cb_scr)

    h = hidden
    whf = whf_ref[...]                                       # (H, 4H) mm_dtype
    whb = whb_ref[...]

    def cell(gates, c_prev):
        sig = jax.nn.sigmoid(gates[:, :3 * h])               # i, f, o in one slab
        g_t = jnp.tanh(gates[:, 3 * h:])
        i_t = sig[:, :h]
        f_t = sig[:, h:2 * h]
        o_t = sig[:, 2 * h:]
        c_new = f_t * c_prev + i_t * g_t
        h_new = o_t * jnp.tanh(c_new)
        return h_new, c_new

    hf, cf = hf_scr[...], cf_scr[...]                        # f32 state
    hb, cb = hb_scr[...], cb_scr[...]

    for j in range(ts):                                      # static unroll (ts small)
        # forward direction: local time j of this block
        gf = gxf_ref[j].astype(jnp.float32) + jnp.dot(
            hf.astype(mm_dtype), whf, preferred_element_type=jnp.float32)
        hf, cf = cell(gf, cf)
        of_ref[j] = hf.astype(of_ref.dtype)

        # backward direction: local time ts-1-j of the mirrored block
        jr = ts - 1 - j
        gb = gxb_ref[jr].astype(jnp.float32) + jnp.dot(
            hb.astype(mm_dtype), whb, preferred_element_type=jnp.float32)
        hb, cb = cell(gb, cb)
        ob_ref[jr] = hb.astype(ob_ref.dtype)

    hf_scr[...] = hf
    cf_scr[...] = cf
    hb_scr[...] = hb
    cb_scr[...] = cb


def bidirectional_lstm(gx_f, gx_b, whhT_f, whhT_b, hidden, mm_dtype):
    """gx_f/gx_b: (T, B, 4H) precomputed input gates (permuted gate order);
    whhT_*: (H, 4H) mm_dtype (permuted).  Returns (out_fwd, out_bwd), each (T,B,H) f32."""
    t, b, g4 = gx_f.shape
    h = hidden
    ts = _time_block(t)
    n_blk = t // ts

    out_f, out_b = pl.pallas_call(
        functools.partial(_bilstm_kernel, hidden=h, ts=ts, mm_dtype=mm_dtype),
        out_shape=(jax.ShapeDtypeStruct((t, b, h), jnp.float32),
                   jax.ShapeDtypeStruct((t, b, h), jnp.float32)),
        grid_spec=pltpu.PrefetchScalarGridSpec(
            num_scalar_prefetch=0,
            grid=(n_blk,),
            in_specs=[
                pl.BlockSpec((ts, b, g4), lambda i: (i, 0, 0)),                # fwd gates
                pl.BlockSpec((ts, b, g4), lambda i: (n_blk - 1 - i, 0, 0)),    # bwd gates (reversed)
                pl.BlockSpec((h, g4), lambda i: (0, 0)),                       # resident W_hh fwd
                pl.BlockSpec((h, g4), lambda i: (0, 0)),                       # resident W_hh bwd
            ],
            out_specs=[
                pl.BlockSpec((ts, b, h), lambda i: (i, 0, 0)),                 # fwd outputs
                pl.BlockSpec((ts, b, h), lambda i: (n_blk - 1 - i, 0, 0)),     # bwd outputs (reversed)
            ],
            scratch_shapes=[
                pltpu.VMEM((b, h), jnp.float32),   # h_fwd
                pltpu.VMEM((b, h), jnp.float32),   # c_fwd
                pltpu.VMEM((b, h), jnp.float32),   # h_bwd
                pltpu.VMEM((b, h), jnp.float32),   # c_bwd
            ],
        ),
        compiler_params=pltpu.CompilerParams(
            dimension_semantics=("arbitrary",)),   # time recurrence => sequential
    )(gx_f, gx_b, whhT_f, whhT_b)
    return out_f, out_b


# ---------------------------------------------------------------------------
# BatchRNN forward (BatchNorm1d folded into input projection -> fused bi-LSTM)
# ---------------------------------------------------------------------------
def batch_rnn_forward(x, params, eps=1e-5, matmul_dtype=jnp.bfloat16):
    """x: (T, B, C) -> (T, B, 2H)."""
    t, b, c = x.shape
    h = params["w_hh_f"].shape[1]
    x = x.astype(jnp.float32)
    x_flat = x.reshape(t * b, c)

    # --- BatchNorm1d training-mode statistics over packed data (T*B, C) ---
    mean, var = bn_batch_stats(x_flat)
    inv = jax.lax.rsqrt(var + eps)
    scale = params["bn_w"].astype(jnp.float32) * inv              # (C,)
    shift = params["bn_b"].astype(jnp.float32) - mean * scale     # (C,)

    # --- Fold BN into input projection; permute gates [i,f,g,o] -> [i,f,o,g] ---
    perm = jnp.concatenate([jnp.arange(2 * h),
                            jnp.arange(3 * h, 4 * h),
                            jnp.arange(2 * h, 3 * h)])

    def fold(w_ih):                                               # (4H, C)
        w_t = w_ih.astype(jnp.float32).T                          # (C, 4H)
        w_eff = (scale[:, None] * w_t)[:, perm]                   # BN scale folded in
        bias = (shift @ w_t)[perm]                                # BN shift folded in
        return w_eff.astype(matmul_dtype), bias

    wf_eff, bias_f = fold(params["w_ih_f"])
    wb_eff, bias_b = fold(params["w_ih_b"])
    whhT_f = params["w_hh_f"].astype(jnp.float32).T[:, perm].astype(matmul_dtype)
    whhT_b = params["w_hh_b"].astype(jnp.float32).T[:, perm].astype(matmul_dtype)

    # --- Input projection for all timesteps & both directions (one big matmul) ---
    gx_f, gx_b = input_projection(x_flat, wf_eff, wb_eff, bias_f, bias_b, matmul_dtype)
    gx_f = gx_f.reshape(t, b, 4 * h)
    gx_b = gx_b.reshape(t, b, 4 * h)

    # --- Fused bidirectional recurrence ---
    out_f, out_b = bidirectional_lstm(gx_f, gx_b, whhT_f, whhT_b, h, matmul_dtype)
    return jnp.concatenate([out_f, out_b], axis=-1)               # (T, B, 2H)


# ---------------------------------------------------------------------------
# Pure-JAX reference for verification (PyTorch gate order i, f, g, o)
# ---------------------------------------------------------------------------
def _lstm_ref(x, w_ih, w_hh):
    b = x.shape[1]
    h = w_hh.shape[0] // 4
    wihT, whhT = w_ih.T, w_hh.T

    def step(carry, x_t):
        hh, cc = carry
        gates = x_t @ wihT + hh @ whhT
        i, f, g, o = jnp.split(gates, 4, axis=-1)
        i, f, o = jax.nn.sigmoid(i), jax.nn.sigmoid(f), jax.nn.sigmoid(o)
        g = jnp.tanh(g)
        cc = f * cc + i * g
        hh = o * jnp.tanh(cc)
        return (hh, cc), hh

    init = (jnp.zeros((b, h), jnp.float32), jnp.zeros((b, h), jnp.float32))
    _, ys = jax.lax.scan(step, init, x)
    return ys


def batch_rnn_reference(x, params, eps=1e-5):
    t, b, c = x.shape
    xf = x.reshape(t * b, c)
    mean = jnp.mean(xf, axis=0, keepdims=True)
    var = jnp.mean((xf - mean) ** 2, axis=0, keepdims=True)
    x_bn = ((xf - mean) * jax.lax.rsqrt(var + eps) * params["bn_w"]
            + params["bn_b"]).reshape(t, b, c)
    out_f = _lstm_ref(x_bn, params["w_ih_f"], params["w_hh_f"])
    out_b = jnp.flip(_lstm_ref(jnp.flip(x_bn, 0), params["w_ih_b"], params["w_hh_b"]), 0)
    return jnp.concatenate([out_f, out_b], axis=-1)


if __name__ == "__main__":
    # Small shapes: seq T=8, batch B=2, input_size C=16, hidden_size H=32
    T, B, C, H = 8, 2, 16, 32
    key = jax.random.PRNGKey(0)
    kx, kbw, kbb, k1, k2, k3, k4 = jax.random.split(key, 7)

    x = jax.random.normal(kx, (T, B, C), dtype=jnp.float32)

    k = 1.0 / jnp.sqrt(jnp.float32(H))   # PyTorch LSTM init scale
    params = {
        "bn_w": jax.random.uniform(kbw, (C,), jnp.float32, 0.5, 1.5),
        "bn_b": jax.random.uniform(kbb, (C,), jnp.float32, -0.5, 0.5),
        "w_ih_f": jax.random.uniform(k1, (4 * H, C), jnp.float32, -k, k),
        "w_hh_f": jax.random.uniform(k2, (4 * H, H), jnp.float32, -k, k),
        "w_ih_b": jax.random.uniform(k3, (4 * H, C), jnp.float32, -k, k),
        "w_hh_b": jax.random.uniform(k4, (4 * H, H), jnp.float32, -k, k),
    }

    ref = jax.block_until_ready(batch_rnn_reference(x, params))

    # Structural check: f32 MXU path must match the pure-JAX reference tightly.
    out_f32 = jax.block_until_ready(
        batch_rnn_forward(x, params, matmul_dtype=jnp.float32))
    assert out_f32.shape == (T, B, 2 * H), out_f32.shape
    assert jnp.allclose(out_f32, ref, atol=1e-3, rtol=1e-3), \
        float(jnp.max(jnp.abs(out_f32 - ref)))

    # Default performance path: bf16 MXU operands / gate storage, f32 accumulation & state.
    out = jax.block_until_ready(batch_rnn_forward(x, params))
    assert out.shape == (T, B, 2 * H), out.shape
    assert jnp.allclose(out, ref, atol=1e-1, rtol=1e-1), \
        float(jnp.max(jnp.abs(out - ref)))

    print("KERNEL_OK")
</pallas_src>

<mosaic_0001>
module attributes {stable_mosaic.version = 11 : i64} {
  func.func @_bn_stats_kernel(%arg0: i32, %arg1: memref<16x16xf32, #tpu.memory_space<vmem>>, %arg2: memref<1x16xf32, #tpu.memory_space<vmem>>, %arg3: memref<1x16xf32, #tpu.memory_space<vmem>>) attributes {dimension_semantics = [#tpu.dimension_semantics<arbitrary>], iteration_bounds = array<i64: 1>, scalar_prefetch = 0 : i64, scratch_operands = 0 : i64, tpu.core_type = #tpu.core_type<tc>, window_params = [{transform_indices = @transform_0, window_bounds = array<i64: 16, 16>}, {pipeline_mode = #tpu.pipeline_mode<synchronous>, transform_indices = @transform_1, window_bounds = array<i64: 1, 16>}, {pipeline_mode = #tpu.pipeline_mode<synchronous>, transform_indices = @transform_2, window_bounds = array<i64: 1, 16>}]} {
    %c0_i32 = arith.constant 0 : i32
    %0 = arith.cmpi eq, %arg0, %c0_i32 : i32
    %1 = arith.extui %0 : i1 to i32
    %c0_i32_0 = arith.constant 0 : i32
    %2 = arith.cmpi ne, %1, %c0_i32_0 : i32
    scf.if %2 {
      %cst_11 = arith.constant 0.000000e+00 : f32
      %15 = vector.broadcast %cst_11 : f32 to vector<1x16xf32>
      %c0_12 = arith.constant 0 : index
      %c0_13 = arith.constant 0 : index
      %16 = vector.load %arg2[%c0_12, %c0_13] : memref<1x16xf32, #tpu.memory_space<vmem>>, vector<1x16xf32>
      tpu.vector_store %arg2[%c0_12, %c0_13], %15 {strides = array<i32>} : memref<1x16xf32, #tpu.memory_space<vmem>>, vector<1x16xf32>,
      %cst_14 = arith.constant 0.000000e+00 : f32
      %17 = vector.broadcast %cst_14 : f32 to vector<1x16xf32>
      %c0_15 = arith.constant 0 : index
      %c0_16 = arith.constant 0 : index
      %18 = vector.load %arg3[%c0_15, %c0_16] : memref<1x16xf32, #tpu.memory_space<vmem>>, vector<1x16xf32>
      tpu.vector_store %arg3[%c0_15, %c0_16], %17 {strides = array<i32>} : memref<1x16xf32, #tpu.memory_space<vmem>>, vector<1x16xf32>,
    } else {
    }
    %c0 = arith.constant 0 : index
    %c0_1 = arith.constant 0 : index
    %3 = vector.load %arg1[%c0, %c0_1] : memref<16x16xf32, #tpu.memory_space<vmem>>, vector<16x16xf32>
    %c0_2 = arith.constant 0 : index
    %c0_3 = arith.constant 0 : index
    %4 = vector.load %arg2[%c0_2, %c0_3] : memref<1x16xf32, #tpu.memory_space<vmem>>, vector<1x16xf32>
    %cst = arith.constant dense<0.000000e+00> : vector<16xf32>
    %5 = vector.multi_reduction <add>, %3, %cst [0] : vector<16x16xf32> to vector<16xf32>
    %6 = vector.shape_cast %5 : vector<16xf32> to vector<1x16xf32>
    %7 = arith.addf %4, %6 : vector<1x16xf32>
    %c0_4 = arith.constant 0 : index
    %c0_5 = arith.constant 0 : index
    %8 = vector.load %arg2[%c0_4, %c0_5] : memref<1x16xf32, #tpu.memory_space<vmem>>, vector<1x16xf32>
    tpu.vector_store %arg2[%c0_4, %c0_5], %7 {strides = array<i32>} : memref<1x16xf32, #tpu.memory_space<vmem>>, vector<1x16xf32>,
    %c0_6 = arith.constant 0 : index
    %c0_7 = arith.constant 0 : index
    %9 = vector.load %arg3[%c0_6, %c0_7] : memref<1x16xf32, #tpu.memory_space<vmem>>, vector<1x16xf32>
    %10 = arith.mulf %3, %3 : vector<16x16xf32>
    %cst_8 = arith.constant dense<0.000000e+00> : vector<16xf32>
    %11 = vector.multi_reduction <add>, %10, %cst_8 [0] : vector<16x16xf32> to vector<16xf32>
    %12 = vector.shape_cast %11 : vector<16xf32> to vector<1x16xf32>
    %13 = arith.addf %9, %12 : vector<1x16xf32>
    %c0_9 = arith.constant 0 : index
    %c0_10 = arith.constant 0 : index
    %14 = vector.load %arg3[%c0_9, %c0_10] : memref<1x16xf32, #tpu.memory_space<vmem>>, vector<1x16xf32>
    tpu.vector_store %arg3[%c0_9, %c0_10], %13 {strides = array<i32>} : memref<1x16xf32, #tpu.memory_space<vmem>>, vector<1x16xf32>,
    return
  }
  func.func @transform_0(%arg0: i32) -> (i32, i32) {
    %c0_i32 = arith.constant 0 : i32
    %c0_i32_0 = arith.constant 0 : i32
    return %arg0, %c0_i32 : i32, i32
  }
  func.func @transform_1(%arg0: i32) -> (i32, i32) {
    %c0_i32 = arith.constant 0 : i32
    %c0_i32_0 = arith.constant 0 : i32
    %c0_i32_1 = arith.constant 0 : i32
    return %c0_i32, %c0_i32_0 : i32, i32
  }
  func.func @transform_2(%arg0: i32) -> (i32, i32) {
    %c0_i32 = arith.constant 0 : i32
    %c0_i32_0 = arith.constant 0 : i32
    %c0_i32_1 = arith.constant 0 : i32
    return %c0_i32, %c0_i32_0 : i32, i32
  }
}

</mosaic_0001>

<llo_original>
// kernel: tpu_custom_call.1
$region0: #{tpu_custom_call.1}
  #allocation0 [shape = 'u32[]', space=smem, size = 0x4, offset = 0x4, fixed_abs, tag = 'smem constant byte address 0x4 - core index']
  #allocation1 [shape = 'u32[144,128]{1,0:T(1,128)}', space=vmem, size = 0x12000, scoped, tag = 'internal scratch']
  %s0 = inlined_call_operand.hbm [shape: f32[16,16], index: 0, kind: input, shape index: {}]
  %s1 = inlined_call_operand.hbm [shape: f32[1,16], index: 1, kind: output, shape index: {0}]
  %s2 = inlined_call_operand.hbm [shape: f32[1,16], index: 2, kind: output, shape index: {1}]
  %3 = xla_tuple %s1, %s2
  %s4 = sld [smem:[#allocation0]]
  $region30: #{tpu_custom_call.1} parent=0
    _
  %s6 = ssub.s32 1, %s4
  %s7 = scalar_select 0, %s6, %s4
  $region1: #{tpu_custom_call.1} parent=0
    #allocation2 [shape = 'u8[8192]{0}', space=vmem, size = 0x2000, scoped, tag = 'input window, operand 0, single buffered']
    #allocation3 [shape = 's32[1]{0}', space=sflag, size = 0x4, scoped, tag = 'scoped memory for tpu_custom_call.1']
    #allocation4 [shape = 's32[1]{0}', space=sflag, size = 0x4, scoped, tag = 'scoped memory for tpu_custom_call.1']
    #allocation5 [shape = 'u8[512]{0}', space=vmem, size = 0x400, scoped, tag = 'output window, operand 0, single buffered']
    #allocation6 [shape = 'u8[512]{0}', space=vmem, size = 0x400, scoped, tag = 'output window, operand 1, single buffered']
    #allocation7 [shape = 's32[1]{0}', space=sflag, size = 0x4, scoped, tag = 'scoped memory for tpu_custom_call.1']
    %8 = vsyncpa [#allocation3], 0
    %9 = vsyncpa [#allocation4], 0
    %10 = vsyncpa [#allocation7], 0
    // Predicated region
    $region2: #{tpu_custom_call.1} parent=1 // pred_check
      _
    $region3: #{tpu_custom_call.1} parent=1 // pred_check_branch
      %12 = sbr.rel (0) target = $region5
    $region4: #{tpu_custom_call.1} parent=1 // pred_region
      %s14 = ssub.s32 256, 256
      %15 = vsyncadd [#allocation3], %s14
      %s16 = sshll.u32 [#allocation2], 4
      %s17 = int_to_ptr.vmem [resolvable:$true] %s16
      %22 = dma.hbm_to_vmem [thread:$0]  %s0, 256, %s17, [#allocation3], 128, 128, 8
    $region5: #{tpu_custom_call.1} parent=1 // pred_fallthru
      _
    // Predicated region
    $region6: #{tpu_custom_call.1} parent=1 // pred_check
      _
    $region7: #{tpu_custom_call.1} parent=1 // pred_check_branch
      %24 = sbr.rel (0) target = $region9
    $region8: #{tpu_custom_call.1} parent=1 // pred_region
      %25 = dma.done [#allocation3], 256
    $region9: #{tpu_custom_call.1} parent=1 // pred_fallthru
      _
    %p26 = scmp.eq.s32.totalorder 0, 0
    // Predicated region
    $region10: #{tpu_custom_call.1} parent=1 // pred_check
      %p27 = pneg %p26
    $region11: #{tpu_custom_call.1} parent=1 // pred_check_branch
      %29 = sbr.rel (%p27) target = $region13
    $region12: #{tpu_custom_call.1} parent=1 // pred_region
      %vm30 = vcmask 122880
      %31 = vst.msk [vmem:[#allocation5] sm:$0x1] %vm30, 0.0
      %32 = vst.msk [vmem:[#allocation6] sm:$0x1] %vm30, 0.0
    $region13: #{tpu_custom_call.1} parent=1 // pred_fallthru
      _
    %v33 = vld [vmem:[#allocation2] sm:$0xff]
    %v34 = vld [vmem:[#allocation2 + $0x8] sm:$0xff]
    %v35 = vld [vmem:[#allocation5] sm:$0x1]
    %vm36 = vcmask 130048
    %v37 = vsel %vm36, %v33, 0.0
    %v38 = vsel %vm36, %v34, 0.0
    %v39 = vadd.f32 %v37, %v38
    %v40 = vrot.slane %v39, 4
    %v41 = vadd.f32 %v39, %v40
    %v42 = vrot.slane %v41, 2
    %v43 = vadd.f32 %v41, %v42
    %v44 = vrot.slane %v43, 1
    %v45 = vadd.f32 %v43, %v44
    %v46 = vadd.f32 %v35, %v45
    %vm47 = vcmask 122880
    %48 = vst.msk [vmem:[#allocation5] sm:$0x1] %vm47, %v46
    %v49 = vld [vmem:[#allocation6] sm:$0x1]
    %v50 = vmul.f32 %v33, %v33
    %v51 = vmul.f32 %v34, %v34
    %v52 = vsel %vm36, %v50, 0.0
    %v53 = vsel %vm36, %v51, 0.0
    %v54 = vadd.f32 %v52, %v53
    %v55 = vrot.slane %v54, 4
    %v56 = vadd.f32 %v54, %v55
    %v57 = vrot.slane %v56, 2
    %v58 = vadd.f32 %v56, %v57
    %v59 = vrot.slane %v58, 1
    %v60 = vadd.f32 %v58, %v59
    %v61 = vadd.f32 %v49, %v60
    %62 = vst.msk [vmem:[#allocation6] sm:$0x1] %vm47, %v61
    // Predicated region
    $region14: #{tpu_custom_call.1} parent=1 // pred_check
      _
    $region15: #{tpu_custom_call.1} parent=1 // pred_check_branch
      %64 = sbr.rel (0) target = $region17
    $region16: #{tpu_custom_call.1} parent=1 // pred_region
      %s66 = ssub.s32 16, 16
      %67 = vsyncadd [#allocation4], %s66
      %s69 = sshll.u32 [#allocation5], 4
      %s70 = int_to_ptr.vmem [resolvable:$true] %s69
      %72 = dma.vmem_to_hbm [thread:$0]  %s70, 16, %s1, [#allocation4]
    $region17: #{tpu_custom_call.1} parent=1 // pred_fallthru
      _
    // Predicated region
    $region18: #{tpu_custom_call.1} parent=1 // pred_check
      _
    $region19: #{tpu_custom_call.1} parent=1 // pred_check_branch
      %74 = sbr.rel (0) target = $region21
    $region20: #{tpu_custom_call.1} parent=1 // pred_region
      %s76 = ssub.s32 16, 16
      %77 = vsyncadd [#allocation7], %s76
      %s79 = sshll.u32 [#allocation6], 4
      %s80 = int_to_ptr.vmem [resolvable:$true] %s79
      %82 = dma.vmem_to_hbm [thread:$0]  %s80, 16, %s2, [#allocation7]
    $region21: #{tpu_custom_call.1} parent=1 // pred_fallthru
      _
    // Predicated region
    $region22: #{tpu_custom_call.1} parent=1 // pred_check
      _
    $region23: #{tpu_custom_call.1} parent=1 // pred_check_branch
      %84 = sbr.rel (0) target = $region25
    $region24: #{tpu_custom_call.1} parent=1 // pred_region
      %85 = dma.done [#allocation4], 16
    $region25: #{tpu_custom_call.1} parent=1 // pred_fallthru
      _
    // Predicated region
    $region26: #{tpu_custom_call.1} parent=1 // pred_check
      _
    $region27: #{tpu_custom_call.1} parent=1 // pred_check_branch
      %87 = sbr.rel (0) target = $region29
    $region28: #{tpu_custom_call.1} parent=1 // pred_region
      %88 = dma.done [#allocation7], 16
    $region29: #{tpu_custom_call.1} parent=1 // pred_fallthru
      _
    %89 = vsyncpa [#allocation3], 1
    %90 = vsyncpa [#allocation4], 1
    %91 = vsyncpa [#allocation7], 1

</llo_original>
